<compile_context>
chip_gen: v7x
topology: tpu7x:2x2x1
jax: 0.10.0
libtpu: 0.0.40
codegen_flags: <defaults>
</compile_context>

<pallas_src>
import functools

import jax
import jax.numpy as jnp
from jax import lax
from jax.experimental import pallas as pl
from jax.experimental.pallas import tpu as pltpu


def bn_stats_kernel(x_ref, gamma_ref, beta_ref, scale_ref, shift_ref, *,
                    batch_size, eps):
    """Grid reduction over batch tiles -> folded BN scale/shift.

    scale_ref / shift_ref double as running sum / sum-of-squares accumulators
    until the last grid step, where they are converted in place to
        scale = gamma * rsqrt(var + eps)
        shift = beta  - mean * scale
    so the main kernel needs a single multiply-add per element.
    """
    i = pl.program_id(0)

    @pl.when(i == 0)
    def _init():
        scale_ref[...] = jnp.zeros_like(scale_ref)
        shift_ref[...] = jnp.zeros_like(shift_ref)

    x = x_ref[...]
    if x.dtype != jnp.float32:
        x = x.astype(jnp.float32)
    scale_ref[...] += jnp.sum(x, axis=0, keepdims=True)      # running sum
    shift_ref[...] += jnp.sum(x * x, axis=0, keepdims=True)  # running sum of squares

    @pl.when(i == pl.num_programs(0) - 1)
    def _finalize():
        inv_b = 1.0 / batch_size
        mean = scale_ref[...] * inv_b
        # Biased variance (PyTorch BatchNorm1d training-mode normalization).
        # E[x^2] - E[x]^2 keeps the reduction single-pass under batch tiling;
        # clamp at 0 against tiny negative values from f32 rounding.
        var = jnp.maximum(shift_ref[...] * inv_b - mean * mean, 0.0)
        scale = gamma_ref[...] * lax.rsqrt(var + eps)
        scale_ref[...] = scale
        shift_ref[...] = beta_ref[...] - mean * scale


def fc2_main_kernel(x_ref, scale_ref, shift_ref, w1_ref, b1_ref, w2_ref,
                    b2_ref, o_ref, *, matmul_dtype):
    x = x_ref[...]
    if x.dtype != jnp.float32:        # trace-time check; no-op pass avoided for f32 inputs
        x = x.astype(jnp.float32)

    # BatchNorm1d with batch-global stats folded into scale/shift (f32, VPU).
    xn = x * scale_ref[...] + shift_ref[...]

    # fc1 + ReLU (matmul operands in matmul_dtype -> MXU, f32 accumulation).
    h = jnp.dot(xn.astype(matmul_dtype), w1_ref[...],
                preferred_element_type=jnp.float32) + b1_ref[...]
    h = jnp.maximum(h, 0.0)

    # dropout(p=0) is the identity; fc2.
    y = jnp.dot(h.astype(matmul_dtype), w2_ref[...],
                preferred_element_type=jnp.float32) + b2_ref[...]

    o_ref[...] = y.astype(o_ref.dtype)


def _pick_batch_tile(batch):
    # Multiple of 8 sublanes that divides the batch, capped at 512 rows so a
    # double-buffered tile stays comfortably inside v7x's 64 MiB VMEM.
    for cand in (512, 256, 128, 64, 32, 16, 8):
        if batch % cand == 0:
            return cand
    return batch  # fallback: whole-batch block (full-dim block is always legal)


def fc2_forward(x, gamma, beta, w1, b1, w2, b2, *,
                matmul_dtype=jnp.bfloat16, eps=1e-5, tile_b=None):
    """x: (B, F). w1: (F, H), w2: (H, O) pre-transposed to (in, out);
    biases as (1, n); gamma/beta as (1, F)."""
    B, F = x.shape
    hidden = w1.shape[1]
    out_features = w2.shape[1]

    LANE = 128
    hid_p = max(LANE, -(-hidden // LANE) * LANE)
    out_p = max(LANE, -(-out_features // LANE) * LANE)

    # Lane-pad hidden/output dims with zeros (exact) so both matmuls and the
    # output store are lane-dense; weights are pre-cast to the MXU dtype.
    w1p = jnp.pad(w1.astype(jnp.float32),
                  ((0, 0), (0, hid_p - hidden))).astype(matmul_dtype)
    b1p = jnp.pad(b1.astype(jnp.float32), ((0, 0), (0, hid_p - hidden)))
    w2p = jnp.pad(w2.astype(jnp.float32),
                  ((0, hid_p - hidden), (0, out_p - out_features))).astype(matmul_dtype)
    b2p = jnp.pad(b2.astype(jnp.float32), ((0, 0), (0, out_p - out_features)))

    if tile_b is None:
        tile_b = _pick_batch_tile(B)
    num_tiles = B // tile_b

    feat_spec = pl.BlockSpec((1, F), lambda i: (0, 0))

    # ---- Pass 1: batch-global BN statistics (grid reduction -> scale/shift) ----
    scale, shift = pl.pallas_call(
        functools.partial(bn_stats_kernel, batch_size=float(B), eps=eps),
        out_shape=(jax.ShapeDtypeStruct((1, F), jnp.float32),
                   jax.ShapeDtypeStruct((1, F), jnp.float32)),
        grid_spec=pltpu.PrefetchScalarGridSpec(
            num_scalar_prefetch=0,
            grid=(num_tiles,),
            in_specs=[pl.BlockSpec((tile_b, F), lambda i: (i, 0)),
                      feat_spec, feat_spec],
            out_specs=[feat_spec, feat_spec]),
        compiler_params=pltpu.CompilerParams(
            dimension_semantics=("arbitrary",),          # accumulator axis
            vmem_limit_bytes=32 * 1024 * 1024),
    )(x, gamma, beta)

    # ---- Pass 2: fused normalize + fc1 + ReLU + fc2, tiled over batch ----
    y_padded = pl.pallas_call(
        functools.partial(fc2_main_kernel, matmul_dtype=matmul_dtype),
        out_shape=jax.ShapeDtypeStruct((B, out_p), x.dtype),
        grid_spec=pltpu.PrefetchScalarGridSpec(
            num_scalar_prefetch=0,
            grid=(num_tiles,),
            in_specs=[pl.BlockSpec((tile_b, F), lambda i: (i, 0)),
                      feat_spec, feat_spec,
                      pl.BlockSpec((F, hid_p), lambda i: (0, 0)),
                      pl.BlockSpec((1, hid_p), lambda i: (0, 0)),
                      pl.BlockSpec((hid_p, out_p), lambda i: (0, 0)),
                      pl.BlockSpec((1, out_p), lambda i: (0, 0))],
            out_specs=pl.BlockSpec((tile_b, out_p), lambda i: (i, 0))),
        compiler_params=pltpu.CompilerParams(
            dimension_semantics=("parallel",),  # shards batch tiles across v7x's 2 TCs
            vmem_limit_bytes=32 * 1024 * 1024),
    )(x, scale, shift, w1p, b1p, w2p, b2p)

    return y_padded[:, :out_features]


def reference_forward(x, gamma, beta, w1, b1, w2, b2, eps=1e-5):
    x = x.astype(jnp.float32)
    mean = jnp.mean(x, axis=0, keepdims=True)
    var = jnp.mean((x - mean) ** 2, axis=0, keepdims=True)
    xn = (x - mean) / jnp.sqrt(var + eps) * gamma + beta
    h = jnp.maximum(xn @ w1 + b1, 0.0)
    return h @ w2 + b2


if __name__ == "__main__":
    batch = 32
    in_features = 32
    hidden = in_features // 2      # 16
    out_features = 8

    key = jax.random.PRNGKey(0)
    kx, kg, kb, kw1, kb1, kw2, kb2 = jax.random.split(key, 7)

    x = jax.random.normal(kx, (batch, in_features), dtype=jnp.float32)

    # BatchNorm1d affine params (default init is gamma=1, beta=0; use mildly
    # non-trivial values so the affine path is actually exercised).
    gamma = jax.random.uniform(kg, (1, in_features), jnp.float32,
                               minval=0.9, maxval=1.1)
    beta = 0.05 * jax.random.normal(kb, (1, in_features), dtype=jnp.float32)

    # Linear params in (in, out) layout, kaiming-uniform-like bounds.
    bound1 = 1.0 / (in_features ** 0.5)
    w1 = jax.random.uniform(kw1, (in_features, hidden), jnp.float32,
                            minval=-bound1, maxval=bound1)
    b1 = jax.random.uniform(kb1, (1, hidden), jnp.float32,
                            minval=-bound1, maxval=bound1)
    bound2 = 1.0 / (hidden ** 0.5)
    w2 = jax.random.uniform(kw2, (hidden, out_features), jnp.float32,
                            minval=-bound2, maxval=bound2)
    b2 = jax.random.uniform(kb2, (1, out_features), jnp.float32,
                            minval=-bound2, maxval=bound2)

    ref = reference_forward(x, gamma, beta, w1, b1, w2, b2)

    # f32 matmul path (tile_b=8 -> 4 batch tiles, exercises the grid reduction
    # and the parallel batch grid): close parity with the module's f32 math.
    out_f32 = jax.block_until_ready(
        fc2_forward(x, gamma, beta, w1, b1, w2, b2,
                    matmul_dtype=jnp.float32, tile_b=8))
    assert out_f32.shape == (batch, out_features)
    assert jnp.allclose(out_f32, ref, atol=5e-4, rtol=5e-4), (
        float(jnp.max(jnp.abs(out_f32 - ref))))

    # Default bf16 MXU-operand path (f32 accumulation): fast path on v6e/v7x.
    out_bf16 = jax.block_until_ready(
        fc2_forward(x, gamma, beta, w1, b1, w2, b2,
                    matmul_dtype=jnp.bfloat16, tile_b=8))
    assert out_bf16.shape == (batch, out_features)
    assert jnp.allclose(out_bf16, ref, atol=5e-2, rtol=5e-2), (
        float(jnp.max(jnp.abs(out_bf16 - ref))))

    print("KERNEL_OK")
</pallas_src>

<mosaic_0001>
module attributes {stable_mosaic.version = 11 : i64} {
  func.func @bn_stats_kernel(%arg0: i32, %arg1: memref<8x32xf32, #tpu.memory_space<vmem>>, %arg2: memref<1x32xf32, #tpu.memory_space<vmem>>, %arg3: memref<1x32xf32, #tpu.memory_space<vmem>>, %arg4: memref<1x32xf32, #tpu.memory_space<vmem>>, %arg5: memref<1x32xf32, #tpu.memory_space<vmem>>) attributes {dimension_semantics = [#tpu.dimension_semantics<arbitrary>], iteration_bounds = array<i64: 4>, scalar_prefetch = 0 : i64, scratch_operands = 0 : i64, tpu.core_type = #tpu.core_type<tc>, window_params = [{transform_indices = @transform_0, window_bounds = array<i64: 8, 32>}, {pipeline_mode = #tpu.pipeline_mode<synchronous>, transform_indices = @transform_1, window_bounds = array<i64: 1, 32>}, {pipeline_mode = #tpu.pipeline_mode<synchronous>, transform_indices = @transform_2, window_bounds = array<i64: 1, 32>}, {pipeline_mode = #tpu.pipeline_mode<synchronous>, transform_indices = @transform_3, window_bounds = array<i64: 1, 32>}, {pipeline_mode = #tpu.pipeline_mode<synchronous>, transform_indices = @transform_4, window_bounds = array<i64: 1, 32>}]} {
    %c0_i32 = arith.constant 0 : i32
    %0 = arith.cmpi eq, %arg0, %c0_i32 : i32
    %1 = arith.extui %0 : i1 to i32
    %c0_i32_0 = arith.constant 0 : i32
    %2 = arith.cmpi ne, %1, %c0_i32_0 : i32
    scf.if %2 {
      %cst_12 = arith.constant 0.000000e+00 : f32
      %18 = vector.broadcast %cst_12 : f32 to vector<1x32xf32>
      %c0_13 = arith.constant 0 : index
      %c0_14 = arith.constant 0 : index
      %19 = vector.load %arg4[%c0_13, %c0_14] : memref<1x32xf32, #tpu.memory_space<vmem>>, vector<1x32xf32>
      tpu.vector_store %arg4[%c0_13, %c0_14], %18 {strides = array<i32>} : memref<1x32xf32, #tpu.memory_space<vmem>>, vector<1x32xf32>,
      %cst_15 = arith.constant 0.000000e+00 : f32
      %20 = vector.broadcast %cst_15 : f32 to vector<1x32xf32>
      %c0_16 = arith.constant 0 : index
      %c0_17 = arith.constant 0 : index
      %21 = vector.load %arg5[%c0_16, %c0_17] : memref<1x32xf32, #tpu.memory_space<vmem>>, vector<1x32xf32>
      tpu.vector_store %arg5[%c0_16, %c0_17], %20 {strides = array<i32>} : memref<1x32xf32, #tpu.memory_space<vmem>>, vector<1x32xf32>,
    } else {
    }
    %c0 = arith.constant 0 : index
    %c0_1 = arith.constant 0 : index
    %3 = vector.load %arg1[%c0, %c0_1] : memref<8x32xf32, #tpu.memory_space<vmem>>, vector<8x32xf32>
    %c0_2 = arith.constant 0 : index
    %c0_3 = arith.constant 0 : index
    %4 = vector.load %arg4[%c0_2, %c0_3] : memref<1x32xf32, #tpu.memory_space<vmem>>, vector<1x32xf32>
    %cst = arith.constant dense<0.000000e+00> : vector<32xf32>
    %5 = vector.multi_reduction <add>, %3, %cst [0] : vector<8x32xf32> to vector<32xf32>
    %6 = vector.shape_cast %5 : vector<32xf32> to vector<1x32xf32>
    %7 = arith.addf %4, %6 : vector<1x32xf32>
    %c0_4 = arith.constant 0 : index
    %c0_5 = arith.constant 0 : index
    %8 = vector.load %arg4[%c0_4, %c0_5] : memref<1x32xf32, #tpu.memory_space<vmem>>, vector<1x32xf32>
    tpu.vector_store %arg4[%c0_4, %c0_5], %7 {strides = array<i32>} : memref<1x32xf32, #tpu.memory_space<vmem>>, vector<1x32xf32>,
    %c0_6 = arith.constant 0 : index
    %c0_7 = arith.constant 0 : index
    %9 = vector.load %arg5[%c0_6, %c0_7] : memref<1x32xf32, #tpu.memory_space<vmem>>, vector<1x32xf32>
    %10 = arith.mulf %3, %3 : vector<8x32xf32>
    %cst_8 = arith.constant dense<0.000000e+00> : vector<32xf32>
    %11 = vector.multi_reduction <add>, %10, %cst_8 [0] : vector<8x32xf32> to vector<32xf32>
    %12 = vector.shape_cast %11 : vector<32xf32> to vector<1x32xf32>
    %13 = arith.addf %9, %12 : vector<1x32xf32>
    %c0_9 = arith.constant 0 : index
    %c0_10 = arith.constant 0 : index
    %14 = vector.load %arg5[%c0_9, %c0_10] : memref<1x32xf32, #tpu.memory_space<vmem>>, vector<1x32xf32>
    tpu.vector_store %arg5[%c0_9, %c0_10], %13 {strides = array<i32>} : memref<1x32xf32, #tpu.memory_space<vmem>>, vector<1x32xf32>,
    %c3_i32 = arith.constant 3 : i32
    %15 = arith.cmpi eq, %arg0, %c3_i32 : i32
    %16 = arith.extui %15 : i1 to i32
    %c0_i32_11 = arith.constant 0 : i32
    %17 = arith.cmpi ne, %16, %c0_i32_11 : i32
    scf.if %17 {
      %c0_12 = arith.constant 0 : index
      %c0_13 = arith.constant 0 : index
      %18 = vector.load %arg4[%c0_12, %c0_13] : memref<1x32xf32, #tpu.memory_space<vmem>>, vector<1x32xf32>
      %cst_14 = arith.constant 3.125000e-02 : f32
      %19 = vector.broadcast %cst_14 : f32 to vector<1x32xf32>
      %20 = arith.mulf %18, %19 : vector<1x32xf32>
      %c0_15 = arith.constant 0 : index
      %c0_16 = arith.constant 0 : index
      %21 = vector.load %arg5[%c0_15, %c0_16] : memref<1x32xf32, #tpu.memory_space<vmem>>, vector<1x32xf32>
      %cst_17 = arith.constant 3.125000e-02 : f32
      %22 = vector.broadcast %cst_17 : f32 to vector<1x32xf32>
      %23 = arith.mulf %21, %22 : vector<1x32xf32>
      %24 = arith.mulf %20, %20 : vector<1x32xf32>
      %25 = arith.subf %23, %24 : vector<1x32xf32>
      %cst_18 = arith.constant 0.000000e+00 : f32
      %26 = vector.broadcast %cst_18 : f32 to vector<1x32xf32>
      %27 = arith.maximumf %25, %26 : vector<1x32xf32>
      %c0_19 = arith.constant 0 : index
      %c0_20 = arith.constant 0 : index
      %28 = vector.load %arg2[%c0_19, %c0_20] : memref<1x32xf32, #tpu.memory_space<vmem>>, vector<1x32xf32>
      %cst_21 = arith.constant 9.99999974E-6 : f32
      %29 = vector.broadcast %cst_21 : f32 to vector<1x32xf32>
      %30 = arith.addf %27, %29 : vector<1x32xf32>
      %31 = math.rsqrt %30 : vector<1x32xf32>
      %32 = arith.mulf %28, %31 : vector<1x32xf32>
      %c0_22 = arith.constant 0 : index
      %c0_23 = arith.constant 0 : index
      %33 = vector.load %arg4[%c0_22, %c0_23] : memref<1x32xf32, #tpu.memory_space<vmem>>, vector<1x32xf32>
      tpu.vector_store %arg4[%c0_22, %c0_23], %32 {strides = array<i32>} : memref<1x32xf32, #tpu.memory_space<vmem>>, vector<1x32xf32>,
      %c0_24 = arith.constant 0 : index
      %c0_25 = arith.constant 0 : index
      %34 = vector.load %arg3[%c0_24, %c0_25] : memref<1x32xf32, #tpu.memory_space<vmem>>, vector<1x32xf32>
      %35 = arith.mulf %20, %32 : vector<1x32xf32>
      %36 = arith.subf %34, %35 : vector<1x32xf32>
      %c0_26 = arith.constant 0 : index
      %c0_27 = arith.constant 0 : index
      %37 = vector.load %arg5[%c0_26, %c0_27] : memref<1x32xf32, #tpu.memory_space<vmem>>, vector<1x32xf32>
      tpu.vector_store %arg5[%c0_26, %c0_27], %36 {strides = array<i32>} : memref<1x32xf32, #tpu.memory_space<vmem>>, vector<1x32xf32>,
    } else {
    }
    return
  }
  func.func @transform_0(%arg0: i32) -> (i32, i32) {
    %c0_i32 = arith.constant 0 : i32
    %c0_i32_0 = arith.constant 0 : i32
    return %arg0, %c0_i32 : i32, i32
  }
  func.func @transform_1(%arg0: i32) -> (i32, i32) {
    %c0_i32 = arith.constant 0 : i32
    %c0_i32_0 = arith.constant 0 : i32
    %c0_i32_1 = arith.constant 0 : i32
    return %c0_i32, %c0_i32_0 : i32, i32
  }
  func.func @transform_2(%arg0: i32) -> (i32, i32) {
    %c0_i32 = arith.constant 0 : i32
    %c0_i32_0 = arith.constant 0 : i32
    %c0_i32_1 = arith.constant 0 : i32
    return %c0_i32, %c0_i32_0 : i32, i32
  }
  func.func @transform_3(%arg0: i32) -> (i32, i32) {
    %c0_i32 = arith.constant 0 : i32
    %c0_i32_0 = arith.constant 0 : i32
    %c0_i32_1 = arith.constant 0 : i32
    return %c0_i32, %c0_i32_0 : i32, i32
  }
  func.func @transform_4(%arg0: i32) -> (i32, i32) {
    %c0_i32 = arith.constant 0 : i32
    %c0_i32_0 = arith.constant 0 : i32
    %c0_i32_1 = arith.constant 0 : i32
    return %c0_i32, %c0_i32_0 : i32, i32
  }
}

</mosaic_0001>

<llo_original>
// kernel: tpu_custom_call.1
$region0: #{tpu_custom_call.1}
  #allocation0 [shape = 'u32[]', space=smem, size = 0x4, offset = 0x4, fixed_abs, tag = 'smem constant byte address 0x4 - core index']
  #allocation1 [shape = 'u32[144,128]{1,0:T(1,128)}', space=vmem, size = 0x12000, scoped, tag = 'internal scratch']
  %s0 = inlined_call_operand.hbm [shape: f32[32,32], index: 0, kind: input, shape index: {}]
  %s1 = inlined_call_operand.vmem [shape: f32[1,32], index: 1, kind: input, shape index: {}]
  %s2 = inlined_call_operand.vmem [shape: f32[1,32], index: 2, kind: input, shape index: {}]
  %s3 = inlined_call_operand.hbm [shape: f32[1,32], index: 3, kind: output, shape index: {0}]
  %s4 = inlined_call_operand.hbm [shape: f32[1,32], index: 4, kind: output, shape index: {1}]
  %5 = xla_tuple %s3, %s4
  %s6 = sld [smem:[#allocation0]]
  $region65: #{tpu_custom_call.1} parent=0
    _
  %s8 = ssub.s32 1, %s6
  %s9 = scalar_select 0, %s8, %s6
  $region1: #{tpu_custom_call.1} parent=0
    #allocation2 [shape = 'u8[8192]{0}', space=vmem, size = 0x2000, scoped, tag = 'input window, operand 0']
    #allocation3 [shape = 's32[2]{0}', space=sflag, size = 0x8, scoped, tag = 'scoped memory for tpu_custom_call.1']
    #allocation4 [shape = 's32[2]{0}', space=sflag, size = 0x8, scoped, tag = 'scoped memory for tpu_custom_call.1']
    #allocation5 [shape = 'u8[512]{0}', space=vmem, size = 0x400, scoped, tag = 'output window, operand 0, single buffered']
    #allocation6 [shape = 'u8[512]{0}', space=vmem, size = 0x400, scoped, tag = 'output window, operand 1, single buffered']
    #allocation7 [shape = 's32[1]{0}', space=sflag, size = 0x4, scoped, tag = 'scoped memory for tpu_custom_call.1']
    %10 = vsyncpa [#allocation3], 0
    %s11 = scalar_lea.sflag [#allocation3], 1
    %12 = vsyncpa %s11, 0
    %13 = vsyncpa [#allocation4], 0
    %14 = vsyncpa [#allocation7], 0
    loop: start=0, step=1, limit=6
    $region2: #{tpu_custom_call.1} parent=1 // loop_pre_header
      _
    $region3: #{tpu_custom_call.1} parent=1 // loop_header
      %s16 = sphi 0, %s20
      %p17 = scmp.ge.s32.totalorder %s16, 6
      %s26 = sphi 0, %s28
      %s29 = sphi 0, %s26
      %s30 = sphi 0, %s29
      %s46 = sphi 0, %s30
      %s50 = sphi 0, %s50
      %s52 = sphi 0, %s50
      %s53 = sphi 0, %s52
      %s67 = sphi 0, %s53
      %s71 = sphi 0, %s71
      %s73 = sphi 0, %s71
      %s74 = sphi 0, %s73
      %s88 = sphi 0, %s74
      %s92 = sphi 0, %s92
      %s94 = sphi 0, %s92
      %s95 = sphi 0, %s94
      %s109 = sphi 0, %s95
      %s113 = sphi 0, %s113
      %s115 = sphi 0, %s113
      %s116 = sphi 0, %s115
      %s130 = sphi 0, %s116
    $region4: #{tpu_custom_call.1} parent=1 // loop_header_branch
      %19 = sbr.rel (%p17) target = $region8
    $region5: #{tpu_custom_call.1} parent=1 // loop_body
      %s21 = ssub.s32 %s16, 1
      %s22 = ssub.s32 %s16, 2
      %s23 = sadd.s32 %s16, 1
      %s24 = ssub.s32 %s16, %s23
      %p25 = scmp.eq.s32.totalorder %s24, 0
      %s27 = sadd.s32 %s26, 1
      %s28 = scalar_select %p25, %s26, %s27
      %p31 = pneg %p25
      %p32 = scmp.eq.s32.totalorder %s16, 3
      %p33 = por %p31, %p32
      %p34 = scmp.ne.s32.totalorder %s26, %s29
      %p35 = scmp.eq.s32.totalorder %s16, 0
      %p36 = por %p34, %p35
      %p37 = scmp.ne.s32.totalorder %s26, %s29
      %p38 = scmp.eq.s32.totalorder %s21, 3
      %p39 = por %p37, %p38
      %p40 = scmp.ne.s32.totalorder %s29, %s30
      %p41 = scmp.eq.s32.totalorder %s21, 0
      %p42 = por %p40, %p41
      %p43 = scmp.ne.s32.totalorder %s29, %s30
      %p44 = scmp.eq.s32.totalorder %s22, 3
      %p45 = por %p43, %p44
      %p47 = scmp.ne.s32.totalorder %s30, %s46
      %p48 = scmp.eq.s32.totalorder %s22, 0
      %p49 = por %p47, %p48
      %s51 = sadd.s32 %s50, 1
      %p54 = scmp.eq.s32.totalorder %s16, 3
      %p55 = scmp.ne.s32.totalorder %s50, %s52
      %p56 = scmp.eq.s32.totalorder %s16, 0
      %p57 = por %p55, %p56
      %p58 = scmp.ne.s32.totalorder %s50, %s52
      %p59 = scmp.eq.s32.totalorder %s21, 3
      %p60 = por %p58, %p59
      %p61 = scmp.ne.s32.totalorder %s52, %s53
      %p62 = scmp.eq.s32.totalorder %s21, 0
      %p63 = por %p61, %p62
      %p64 = scmp.ne.s32.totalorder %s52, %s53
      %p65 = scmp.eq.s32.totalorder %s22, 3
      %p66 = por %p64, %p65
      %p68 = scmp.ne.s32.totalorder %s53, %s67
      %p69 = scmp.eq.s32.totalorder %s22, 0
      %p70 = por %p68, %p69
      %s72 = sadd.s32 %s71, 1
      %p75 = scmp.eq.s32.totalorder %s16, 3
      %p76 = scmp.ne.s32.totalorder %s71, %s73
      %p77 = scmp.eq.s32.totalorder %s16, 0
      %p78 = por %p76, %p77
      %p79 = scmp.ne.s32.totalorder %s71, %s73
      %p80 = scmp.eq.s32.totalorder %s21, 3
      %p81 = por %p79, %p80
      %p82 = scmp.ne.s32.totalorder %s73, %s74
      %p83 = scmp.eq.s32.totalorder %s21, 0
      %p84 = por %p82, %p83
      %p85 = scmp.ne.s32.totalorder %s73, %s74
      %p86 = scmp.eq.s32.totalorder %s22, 3
      %p87 = por %p85, %p86
      %p89 = scmp.ne.s32.totalorder %s74, %s88
      %p90 = scmp.eq.s32.totalorder %s22, 0
      %p91 = por %p89, %p90
      %s93 = sadd.s32 %s92, 1
      %p96 = scmp.eq.s32.totalorder %s16, 3
      %p97 = scmp.ne.s32.totalorder %s92, %s94
      %p98 = scmp.eq.s32.totalorder %s16, 0
      %p99 = por %p97, %p98
      %p100 = scmp.ne.s32.totalorder %s92, %s94
      %p101 = scmp.eq.s32.totalorder %s21, 3
      %p102 = por %p100, %p101
      %p103 = scmp.ne.s32.totalorder %s94, %s95
      %p104 = scmp.eq.s32.totalorder %s21, 0
      %p105 = por %p103, %p104
      %p106 = scmp.ne.s32.totalorder %s94, %s95
      %p107 = scmp.eq.s32.totalorder %s22, 3
      %p108 = por %p106, %p107
      %p110 = scmp.ne.s32.totalorder %s95, %s109
      %p111 = scmp.eq.s32.totalorder %s22, 0
      %p112 = por %p110, %p111
      %s114 = sadd.s32 %s113, 1
      %p117 = scmp.eq.s32.totalorder %s16, 3
      %p118 = scmp.ne.s32.totalorder %s113, %s115
      %p119 = scmp.eq.s32.totalorder %s16, 0
      %p120 = por %p118, %p119
      %p121 = scmp.ne.s32.totalorder %s113, %s115
      %p122 = scmp.eq.s32.totalorder %s21, 3
      %p123 = por %p121, %p122
      %p124 = scmp.ne.s32.totalorder %s115, %s116
      %p125 = scmp.eq.s32.totalorder %s21, 0
      %p126 = por %p124, %p125
      %p127 = scmp.ne.s32.totalorder %s115, %s116
      %p128 = scmp.eq.s32.totalorder %s22, 3
      %p129 = por %p127, %p128
      %p131 = scmp.ne.s32.totalorder %s116, %s130
      %p132 = scmp.eq.s32.totalorder %s22, 0
      %p133 = por %p131, %p132
      %p134 = scmp.le.s32.totalorder 1, %s16
      %p135 = scmp.lt.s32.totalorder %s16, 5
      %p136 = pnand %p134, %p135
      %p137 = pneg %p136
      // Predicated region
      $region9: #{tpu_custom_call.1} parent=5 // pred_check
        _
      $region10: #{tpu_custom_call.1} parent=5 // pred_check_branch
        %139 = sbr.rel (%p136) target = $region12
      $region11: #{tpu_custom_call.1} parent=5 // pred_region
        %s140 = ssub.s32 %s16, 1
        // Predicated region
        $region13: #{tpu_custom_call.1} parent=11 // pred_check
          %p141 = pneg %p63
        $region14: #{tpu_custom_call.1} parent=11 // pred_check_branch
          %143 = sbr.rel (%p141) target = $region16
        $region15: #{tpu_custom_call.1} parent=11 // pred_region
          _
        $region16: #{tpu_custom_call.1} parent=11 // pred_fallthru
          _
        // Predicated region
        $region17: #{tpu_custom_call.1} parent=11 // pred_check
          %p144 = pneg %p84
        $region18: #{tpu_custom_call.1} parent=11 // pred_check_branch
          %146 = sbr.rel (%p144) target = $region20
        $region19: #{tpu_custom_call.1} parent=11 // pred_region
          _
        $region20: #{tpu_custom_call.1} parent=11 // pred_fallthru
          _
      $region12: #{tpu_custom_call.1} parent=5 // pred_fallthru
        _
      %p147 = scmp.lt.s32.totalorder %s16, 4
      // Predicated region
      $region21: #{tpu_custom_call.1} parent=5 // pred_check
        %p148 = pneg %p147
      $region22: #{tpu_custom_call.1} parent=5 // pred_check_branch
        %150 = sbr.rel (%p148) target = $region24
      $region23: #{tpu_custom_call.1} parent=5 // pred_region
        // Predicated region
        $region25: #{tpu_custom_call.1} parent=23 // pred_check
          %p151 = pneg %p36
        $region26: #{tpu_custom_call.1} parent=23 // pred_check_branch
          %153 = sbr.rel (%p151) target = $region28
        $region27: #{tpu_custom_call.1} parent=23 // pred_region
          %s154 = sand.u32 %s26, 1
          %s155 = scalar_lea.sflag [#allocation3], %s154
          %s156 = sand.u32 %s26, 1
          %s157 = smul.addr %s156, 8
          %s158 = scalar_lea.vmem [#allocation2], %s157
          %s160 = ssub.s32 128, 128
          %161 = vsyncadd %s155, %s160
          %s162 = smul.addr %s16, 128
          %s163 = scalar_lea.hbm %s0, %s162
          %s165 = sshll.u32 %s158, 4
          %s166 = int_to_ptr.vmem [resolvable:$true] %s165
          %168 = dma.hbm_to_vmem [thread:$0]  %s163, 128, %s166, %s155
        $region28: #{tpu_custom_call.1} parent=23 // pred_fallthru
          _
      $region24: #{tpu_custom_call.1} parent=5 // pred_fallthru
        _
      %p169 = scmp.le.s32.totalorder 1, %s16
      %p170 = scmp.lt.s32.totalorder %s16, 5
      %p171 = pnand %p169, %p170
      %p172 = pneg %p171
      // Predicated region
      $region29: #{tpu_custom_call.1} parent=5 // pred_check
        _
      $region30: #{tpu_custom_call.1} parent=5 // pred_check_branch
        %174 = sbr.rel (%p171) target = $region32
      $region31: #{tpu_custom_call.1} parent=5 // pred_region
        %s175 = ssub.s32 %s16, 1
        %s176 = sand.u32 %s29, 1
        %s177 = scalar_lea.sflag [#allocation3], %s176
        %s178 = sand.u32 %s29, 1
        %s179 = smul.addr %s178, 8
        %s180 = scalar_lea.vmem [#allocation2], %s179
        // Predicated region
        $region33: #{tpu_custom_call.1} parent=31 // pred_check
          %p181 = pneg %p42
        $region34: #{tpu_custom_call.1} parent=31 // pred_check_branch
          %183 = sbr.rel (%p181) target = $region36
        $region35: #{tpu_custom_call.1} parent=31 // pred_region
          %184 = dma.done %s177, 128
        $region36: #{tpu_custom_call.1} parent=31 // pred_fallthru
          _
        %s185 = sand.u32 %s29, 1
        %s186 = scalar_lea.sflag [#allocation3], %s185
        %s187 = sand.u32 %s29, 1
        %s188 = smul.addr %s187, 8
        %s189 = scalar_lea.vmem [#allocation2], %s188
        %p190 = pneg %p42
        %p191 = pneg %p39
        %p192 = pneg %p63
        %p193 = pneg %p60
        %p194 = pneg %p84
        %p195 = pneg %p81
        %p196 = pneg %p105
        %p197 = pneg %p102
        %p198 = pneg %p126
        %p199 = pneg %p123
        %p200 = scmp.eq.s32.totalorder %s21, 0
        // Predicated region
        $region37: #{tpu_custom_call.1} parent=31 // pred_check
          %p201 = pneg %p200
        $region38: #{tpu_custom_call.1} parent=31 // pred_check_branch
          %203 = sbr.rel (%p201) target = $region40
        $region39: #{tpu_custom_call.1} parent=31 // pred_region
          %vm204 = vcmask 253952
          %205 = vst.msk [vmem:[#allocation5] sm:$0x1] %vm204, 0.0
          %206 = vst.msk [vmem:[#allocation6] sm:$0x1] %vm204, 0.0
        $region40: #{tpu_custom_call.1} parent=31 // pred_fallthru
          _
        %v207 = vld [vmem:[%s180] sm:$0xff]
        %v208 = vld [vmem:[#allocation5] sm:$0x1]
        %vm209 = vcmask 261120
        %v210 = vsel %vm209, %v207, 0.0
        %v211 = vrot.slane %v210, 4
        %v212 = vadd.f32 %v210, %v211
        %v213 = vrot.slane %v212, 2
        %v214 = vadd.f32 %v212, %v213
        %v215 = vrot.slane %v214, 1
        %v216 = vadd.f32 %v214, %v215
        %v217 = vadd.f32 %v208, %v216
        %vm218 = vcmask 253952
        %219 = vst.msk [vmem:[#allocation5] sm:$0x1] %vm218, %v217
        %v220 = vld [vmem:[#allocation6] sm:$0x1]
        %v221 = vmul.f32 %v207, %v207
        %v222 = vsel %vm209, %v221, 0.0
        %v223 = vrot.slane %v222, 4
        %v224 = vadd.f32 %v222, %v223
        %v225 = vrot.slane %v224, 2
        %v226 = vadd.f32 %v224, %v225
        %v227 = vrot.slane %v226, 1
        %v228 = vadd.f32 %v226, %v227
        %v229 = vadd.f32 %v220, %v228
        %230 = vst.msk [vmem:[#allocation6] sm:$0x1] %vm218, %v229
        %p231 = scmp.eq.s32.totalorder %s21, 3
        // Predicated region
        $region41: #{tpu_custom_call.1} parent=31 // pred_check
          %p232 = pneg %p231
        $region42: #{tpu_custom_call.1} parent=31 // pred_check_branch
          %234 = sbr.rel (%p232) target = $region44
        $region43: #{tpu_custom_call.1} parent=31 // pred_region
          %v235 = vld [vmem:[#allocation5] sm:$0x1]
          %v236 = vmul.f32 %v235, 0.03125
          %v237 = vld [vmem:[#allocation6] sm:$0x1]
          %v238 = vmul.f32 %v237, 0.03125
          %v239 = vmul.f32 %v236, %v236
          %v240 = vsub.f32 %v238, %v239
          %v241 = vmax.f32 %v240, 0.0
          %v242 = vld [vmem:[%s1] sm:$0x1]
          %v243 = vadd.f32 %v241, 1e-05
          %v244 = vrsqrt.pop %v243
          %v245 = vmul.f32 %v242, %v244
          %246 = vst.msk [vmem:[#allocation5] sm:$0x1] %vm218, %v245
          %v247 = vld [vmem:[%s2] sm:$0x1]
          %v248 = vmul.f32 %v236, %v245
          %v249 = vsub.f32 %v247, %v248
          %250 = vst.msk [vmem:[#allocation6] sm:$0x1] %vm218, %v249
        $region44: #{tpu_custom_call.1} parent=31 // pred_fallthru
          _
        // Predicated region
        $region45: #{tpu_custom_call.1} parent=31 // pred_check
          %p251 = pneg %p102
        $region46: #{tpu_custom_call.1} parent=31 // pred_check_branch
          %253 = sbr.rel (%p251) target = $region48
        $region47: #{tpu_custom_call.1} parent=31 // pred_region
          %s255 = ssub.s32 16, 16
          %256 = vsyncadd [#allocation4], %s255
          %s258 = sshll.u32 [#allocation5], 4
          %s259 = int_to_ptr.vmem [resolvable:$true] %s258
          %261 = dma.vmem_to_hbm [thread:$0]  %s259, 16, %s3, [#allocation4]
        $region48: #{tpu_custom_call.1} parent=31 // pred_fallthru
          _
        // Predicated region
        $region49: #{tpu_custom_call.1} parent=31 // pred_check
          %p262 = pneg %p123
        $region50: #{tpu_custom_call.1} parent=31 // pred_check_branch
          %264 = sbr.rel (%p262) target = $region52
        $region51: #{tpu_custom_call.1} parent=31 // pred_region
          %s266 = ssub.s32 16, 16
          %267 = vsyncadd [#allocation7], %s266
          %s269 = sshll.u32 [#allocation6], 4
          %s270 = int_to_ptr.vmem [resolvable:$true] %s269
          %272 = dma.vmem_to_hbm [thread:$0]  %s270, 16, %s4, [#allocation7]
        $region52: #{tpu_custom_call.1} parent=31 // pred_fallthru
          _
        // Predicated region
        $region53: #{tpu_custom_call.1} parent=31 // pred_check
          %p273 = pneg %p102
        $region54: #{tpu_custom_call.1} parent=31 // pred_check_branch
          %275 = sbr.rel (%p273) target = $region56
        $region55: #{tpu_custom_call.1} parent=31 // pred_region
          %276 = dma.done [#allocation4], 16
        $region56: #{tpu_custom_call.1} parent=31 // pred_fallthru
          _
        // Predicated region
        $region57: #{tpu_custom_call.1} parent=31 // pred_check
          %p277 = pneg %p123
        $region58: #{tpu_custom_call.1} parent=31 // pred_check_branch
          %279 = sbr.rel (%p277) target = $region60
        $region59: #{tpu_custom_call.1} parent=31 // pred_region
          %280 = dma.done [#allocation7], 16
        $region60: #{tpu_custom_call.1} parent=31 // pred_fallthru
          _
      $region32: #{tpu_custom_call.1} parent=5 // pred_fallthru
        _
      %p281 = scmp.le.s32.totalorder 2, %s16
      // Predicated region
      $region61: #{tpu_custom_call.1} parent=5 // pred_check
        %p282 = pneg %p281
      $region62: #{tpu_custom_call.1} parent=5 // pred_check_branch
        %284 = sbr.rel (%p282) target = $region64
      $region63: #{tpu_custom_call.1} parent=5 // pred_region
        %s285 = ssub.s32 %s16, 2
      $region64: #{tpu_custom_call.1} parent=5 // pred_fallthru
        _
    $region6: #{tpu_custom_call.1} parent=1 // loop_footer
      %s20 = sadd.s32 1, %s16
    $region7: #{tpu_custom_call.1} parent=1 // loop_footer_branch
      %15 = sbr.rel target = $region3
    $region8: #{tpu_custom_call.1} parent=1 // loop_exit
      _
    %286 = vsyncpa [#allocation3], 1
    %s287 = scalar_lea.sflag [#allocation3], 1
    %288 = vsyncpa %s287, 1
    %289 = vsyncpa [#allocation4], 1
    %s290 = scalar_lea.sflag [#allocation4], 1
    %291 = vsyncpa %s290, 1
    %292 = vsyncpa [#allocation7], 1

</llo_original>
